<compile_context>
chip_gen: v5e
topology: v5e:2x2
jax: 0.10.0
libtpu: 0.0.40
codegen_flags: <defaults>
</compile_context>

<pallas_src>
from functools import partial

import jax
import jax.numpy as jnp
from jax import lax
from jax.experimental import pallas as pl
from jax.experimental.pallas import tpu as pltpu


def basic_block_kernel(x_ref, w1_ref, w2_ref, bias_ref, o_ref, *, H):
    """One grid step = Bt images (Bt*H rows) of the batch.

    x_ref    : (M, W*C) f32   folded, lane-dense input (also the residual)
    w1_ref   : (3*W*C, W*C) bf16  banded conv1 weights (kh taps stacked on K,
                                   bn1 scale folded into columns)
    w2_ref   : (3*W*C, W*C) bf16  banded conv2 weights (bn2 scale folded)
    bias_ref : (2, W*C) f32   row 0 = bn1 bias, row 1 = bn2 bias (W-tiled)
    o_ref    : (M, W*C) f32
    """
    M, WC = x_ref.shape

    # Per-image H-boundary masks (M is a whole number of images, M % H == 0).
    row = lax.broadcasted_iota(jnp.int32, (M, WC), 0)
    is_first = (row % H) == 0          # rows whose "up" neighbour is padding
    is_last = (row % H) == (H - 1)     # rows whose "down" neighbour is padding

    x_f32 = x_ref[...]                 # (M, WC) f32, kept for the residual add

    def taps(v):
        # Build the (M, 3*WC) conv operand: [v[i-1] | v[i] | v[i+1]] with the
        # per-image border rows zeroed.  Rolls hit the XLU; lane offsets are
        # multiples of 128 so the concat needs no masked stores.
        zero = jnp.zeros_like(v)
        up = jnp.where(is_first, zero, pltpu.roll(v, 1, axis=0))      # v[i-1]
        dn = jnp.where(is_last, zero, pltpu.roll(v, M - 1, axis=0))   # v[i+1]
        return jnp.concatenate([up, v, dn], axis=-1).astype(jnp.bfloat16)

    # conv1 (+ folded bn1 scale) -> bias -> relu
    acc1 = jnp.dot(taps(x_f32), w1_ref[...],
                   preferred_element_type=jnp.float32)                # (M, WC)
    out1 = jnp.maximum(acc1 + bias_ref[0:1, :], 0.0)

    # conv2 (+ folded bn2 scale) -> bias -> residual add -> relu
    acc2 = jnp.dot(taps(out1), w2_ref[...],
                   preferred_element_type=jnp.float32)
    o_ref[...] = jnp.maximum(acc2 + bias_ref[1:2, :] + x_f32, 0.0)


def fuse_band_weights(w_hwio, W, scale):
    """Fold 3x3 HWIO conv weights + BN scale into one (3*W*Cin, W*Cout) matrix.

    Block kh (rows kh*W*Cin : (kh+1)*W*Cin) satisfies
      M[kh][wi*Cin+ci, wo*Cout+co] = scale[co] * w[kh, kw, ci, co],  kw = wi-wo+1
    and is zero outside the band (this realizes the W zero-padding).
    """
    KH, KW, Cin, Cout = w_hwio.shape
    wi = jnp.arange(W)[:, None]
    wo = jnp.arange(W)[None, :]
    blocks = []
    for kh in range(KH):
        Mk = jnp.zeros((W * Cin, W * Cout), jnp.float32)
        for kw in range(KW):
            band = (wi - wo == (kw - 1)).astype(jnp.float32)          # (W, W)
            Mk = Mk + jnp.kron(band, w_hwio[kh, kw].astype(jnp.float32))
        blocks.append(Mk)
    Mfull = jnp.concatenate(blocks, axis=0)                           # (3WC, WC)
    Mfull = Mfull * jnp.tile(scale.astype(jnp.float32), W)[None, :]
    return Mfull.astype(jnp.bfloat16)


def _pick_block_batch(N, H, target_rows=256):
    """Largest divisor Bt of N with Bt*H <= target_rows (MXU depth)."""
    bt = 1
    for cand in range(1, N + 1):
        if N % cand == 0 and cand * H <= target_rows:
            bt = cand
    return bt


def basic_block_pallas(x_nhwc, w1_hwio, w2_hwio, s1, b1, s2, b2,
                       *, block_batch=None):
    N, H, W, Cin = x_nhwc.shape
    Cout = w1_hwio.shape[-1]
    assert Cin == Cout, "residual add requires inplanes == planes (downsample=None)"
    WC = W * Cout

    if block_batch is None:
        block_batch = _pick_block_batch(N, H)
    assert N % block_batch == 0
    rows = block_batch * H

    # Lane-dense folded activations and fused parameters (host-side prep).
    xf = x_nhwc.reshape(N * H, WC).astype(jnp.float32)
    w1 = fuse_band_weights(w1_hwio, W, s1)                # bf16 (3*WC, WC)
    w2 = fuse_band_weights(w2_hwio, W, s2)                # bf16 (3*WC, WC)
    bias = jnp.stack([jnp.tile(b1.astype(jnp.float32), W),
                      jnp.tile(b2.astype(jnp.float32), W)], axis=0)  # (2, WC)

    out_f = pl.pallas_call(
        partial(basic_block_kernel, H=H),
        out_shape=jax.ShapeDtypeStruct((N * H, WC), jnp.float32),
        grid_spec=pltpu.PrefetchScalarGridSpec(
            num_scalar_prefetch=0,
            grid=(N // block_batch,),
            in_specs=[
                pl.BlockSpec((rows, WC), lambda n: (n, 0)),
                pl.BlockSpec((3 * WC, WC), lambda n: (0, 0)),
                pl.BlockSpec((3 * WC, WC), lambda n: (0, 0)),
                pl.BlockSpec((2, WC), lambda n: (0, 0)),
            ],
            out_specs=pl.BlockSpec((rows, WC), lambda n: (n, 0)),
        ),
        compiler_params=pltpu.CompilerParams(dimension_semantics=("parallel",)),
    )(xf, w1, w2, bias)

    return out_f.reshape(N, H, W, Cout)


def basic_block_reference(x_nhwc, w1_hwio, w2_hwio, s1, b1, s2, b2):
    """Pure-JAX reference (lax conv), same NHWC layout, for verification."""
    dn = lax.conv_dimension_numbers(x_nhwc.shape, w1_hwio.shape,
                                    ('NHWC', 'HWIO', 'NHWC'))
    C = w1_hwio.shape[-1]
    s1 = s1.reshape(1, 1, 1, C); b1 = b1.reshape(1, 1, 1, C)
    s2 = s2.reshape(1, 1, 1, C); b2 = b2.reshape(1, 1, 1, C)
    o = lax.conv_general_dilated(x_nhwc, w1_hwio, (1, 1), 'SAME',
                                 dimension_numbers=dn,
                                 precision=lax.Precision.HIGHEST)
    o = jnp.maximum(o * s1 + b1, 0.0)
    o = lax.conv_general_dilated(o, w2_hwio, (1, 1), 'SAME',
                                 dimension_numbers=dn,
                                 precision=lax.Precision.HIGHEST)
    o = o * s2 + b2
    return jnp.maximum(o + x_nhwc, 0.0)


if __name__ == "__main__":
    # BasicBlock(inplanes=8, planes=8, stride=1, downsample=None)
    N, C, H, W = 2, 8, 16, 16
    key = jax.random.PRNGKey(0)
    ks = jax.random.split(key, 11)

    # PyTorch-convention tensors (NCHW activations, OIHW weights)
    x_nchw  = jax.random.normal(ks[0], (N, C, H, W), jnp.float32)
    w1_oihw = 0.1 * jax.random.normal(ks[1], (C, C, 3, 3), jnp.float32)
    w2_oihw = 0.1 * jax.random.normal(ks[2], (C, C, 3, 3), jnp.float32)

    # BatchNorm parameters / running stats (deterministic, non-trivial)
    gamma1 = 1.0 + 0.1 * jax.random.normal(ks[3], (C,), jnp.float32)
    beta1  = 0.1 * jax.random.normal(ks[4], (C,), jnp.float32)
    mean1  = 0.1 * jax.random.normal(ks[5], (C,), jnp.float32)
    var1   = jnp.abs(jax.random.normal(ks[6], (C,), jnp.float32)) + 0.5
    gamma2 = 1.0 + 0.1 * jax.random.normal(ks[7], (C,), jnp.float32)
    beta2  = 0.1 * jax.random.normal(ks[8], (C,), jnp.float32)
    mean2  = 0.1 * jax.random.normal(ks[9], (C,), jnp.float32)
    var2   = jnp.abs(jax.random.normal(ks[10], (C,), jnp.float32)) + 0.5

    eps = 1e-5
    s1 = gamma1 / jnp.sqrt(var1 + eps); b1 = beta1 - mean1 * s1
    s2 = gamma2 / jnp.sqrt(var2 + eps); b2 = beta2 - mean2 * s2

    # NCHW/OIHW -> NHWC/HWIO for the kernel
    x_nhwc  = jnp.transpose(x_nchw, (0, 2, 3, 1))
    w1_hwio = jnp.transpose(w1_oihw, (2, 3, 1, 0))
    w2_hwio = jnp.transpose(w2_oihw, (2, 3, 1, 0))

    out = basic_block_pallas(x_nhwc, w1_hwio, w2_hwio, s1, b1, s2, b2)
    out = jax.block_until_ready(out)

    ref = basic_block_reference(x_nhwc, w1_hwio, w2_hwio, s1, b1, s2, b2)
    assert out.shape == (N, H, W, C)
    # bf16 matmul operands -> loosened tolerance vs the HIGHEST-precision ref.
    assert jnp.allclose(out, ref, atol=3e-2, rtol=3e-2), (
        f"max abs err = {jnp.max(jnp.abs(out - ref))}")

    print("KERNEL_OK")
</pallas_src>

<mosaic_0001>
module attributes {stable_mosaic.version = 11 : i64} {
  func.func @basic_block_kernel(%arg0: i32, %arg1: memref<32x128xf32, #tpu.memory_space<vmem>>, %arg2: memref<384x128xbf16, #tpu.memory_space<vmem>>, %arg3: memref<384x128xbf16, #tpu.memory_space<vmem>>, %arg4: memref<2x128xf32, #tpu.memory_space<vmem>>, %arg5: memref<32x128xf32, #tpu.memory_space<vmem>>) attributes {dimension_semantics = [#tpu.dimension_semantics<parallel>], iteration_bounds = array<i64: 1>, scalar_prefetch = 0 : i64, scratch_operands = 0 : i64, tpu.core_type = #tpu.core_type<tc>, window_params = [{transform_indices = @transform_0, window_bounds = array<i64: 32, 128>}, {pipeline_mode = #tpu.pipeline_mode<synchronous>, transform_indices = @transform_1, window_bounds = array<i64: 384, 128>}, {pipeline_mode = #tpu.pipeline_mode<synchronous>, transform_indices = @transform_2, window_bounds = array<i64: 384, 128>}, {pipeline_mode = #tpu.pipeline_mode<synchronous>, transform_indices = @transform_3, window_bounds = array<i64: 2, 128>}, {transform_indices = @transform_4, window_bounds = array<i64: 32, 128>}]} {
    %0 = tpu.iota {dimensions = array<i32: 0>} : vector<32x128xi32>
    %c16_i32 = arith.constant 16 : i32
    %c0_i32 = arith.constant 0 : i32
    %1 = arith.cmpi eq, %c16_i32, %c0_i32 : i32
    %c1_i32 = arith.constant 1 : i32
    %2 = arith.select %1, %c1_i32, %c16_i32 : i32
    %3 = vector.broadcast %2 : i32 to vector<32x128xi32>
    %4 = arith.remsi %0, %3 : vector<32x128xi32>
    %c0_i32_0 = arith.constant 0 : i32
    %5 = vector.broadcast %c0_i32_0 : i32 to vector<32x128xi32>
    %6 = arith.cmpi ne, %4, %5 : vector<32x128xi32>
    %c0_i32_1 = arith.constant 0 : i32
    %7 = vector.broadcast %c0_i32_1 : i32 to vector<32x128xi32>
    %8 = arith.cmpi slt, %4, %7 : vector<32x128xi32>
    %c0_i32_2 = arith.constant 0 : i32
    %9 = arith.cmpi slt, %2, %c0_i32_2 : i32
    %10 = vector.broadcast %9 : i1 to vector<32x128xi1>
    %11 = vector.broadcast %10 : vector<32x128xi1> to vector<32x128xi1>
    %12 = arith.xori %8, %11 : vector<32x128xi1>
    %13 = arith.andi %12, %6 : vector<32x128xi1>
    %14 = vector.broadcast %2 : i32 to vector<32x128xi32>
    %15 = arith.addi %4, %14 : vector<32x128xi32>
    %16 = arith.select %13, %15, %4 : vector<32x128xi1>, vector<32x128xi32>
    %c0_i32_3 = arith.constant 0 : i32
    %17 = vector.broadcast %c0_i32_3 : i32 to vector<32x128xi32>
    %18 = arith.cmpi eq, %16, %17 : vector<32x128xi32>
    %c16_i32_4 = arith.constant 16 : i32
    %c0_i32_5 = arith.constant 0 : i32
    %19 = arith.cmpi eq, %c16_i32_4, %c0_i32_5 : i32
    %c1_i32_6 = arith.constant 1 : i32
    %20 = arith.select %19, %c1_i32_6, %c16_i32_4 : i32
    %21 = vector.broadcast %20 : i32 to vector<32x128xi32>
    %22 = arith.remsi %0, %21 : vector<32x128xi32>
    %c0_i32_7 = arith.constant 0 : i32
    %23 = vector.broadcast %c0_i32_7 : i32 to vector<32x128xi32>
    %24 = arith.cmpi ne, %22, %23 : vector<32x128xi32>
    %c0_i32_8 = arith.constant 0 : i32
    %25 = vector.broadcast %c0_i32_8 : i32 to vector<32x128xi32>
    %26 = arith.cmpi slt, %22, %25 : vector<32x128xi32>
    %c0_i32_9 = arith.constant 0 : i32
    %27 = arith.cmpi slt, %20, %c0_i32_9 : i32
    %28 = vector.broadcast %27 : i1 to vector<32x128xi1>
    %29 = vector.broadcast %28 : vector<32x128xi1> to vector<32x128xi1>
    %30 = arith.xori %26, %29 : vector<32x128xi1>
    %31 = arith.andi %30, %24 : vector<32x128xi1>
    %32 = vector.broadcast %20 : i32 to vector<32x128xi32>
    %33 = arith.addi %22, %32 : vector<32x128xi32>
    %34 = arith.select %31, %33, %22 : vector<32x128xi1>, vector<32x128xi32>
    %c15_i32 = arith.constant 15 : i32
    %35 = vector.broadcast %c15_i32 : i32 to vector<32x128xi32>
    %36 = arith.cmpi eq, %34, %35 : vector<32x128xi32>
    %c0 = arith.constant 0 : index
    %c0_10 = arith.constant 0 : index
    %37 = vector.load %arg1[%c0, %c0_10] : memref<32x128xf32, #tpu.memory_space<vmem>>, vector<32x128xf32>
    %cst = arith.constant 0.000000e+00 : f32
    %38 = vector.broadcast %cst : f32 to vector<32x128xf32>
    %c1_i32_11 = arith.constant 1 : i32
    %39 = tpu.dynamic_rotate %37 by %c1_i32_11 dim 0 : vector<32x128xf32>, i32 -> vector<32x128xf32>
    %40 = arith.select %18, %38, %39 : vector<32x128xi1>, vector<32x128xf32>
    %c31_i32 = arith.constant 31 : i32
    %41 = tpu.dynamic_rotate %37 by %c31_i32 dim 0 : vector<32x128xf32>, i32 -> vector<32x128xf32>
    %42 = arith.select %36, %38, %41 : vector<32x128xi1>, vector<32x128xf32>
    %43 = tpu.concatenate %40, %37, %42 in 1 : vector<32x128xf32>, vector<32x128xf32>, vector<32x128xf32> -> vector<32x384xf32>
    %44 = arith.truncf %43 : vector<32x384xf32> to vector<32x384xbf16>
    %c0_12 = arith.constant 0 : index
    %c0_13 = arith.constant 0 : index
    %45 = vector.load %arg2[%c0_12, %c0_13] : memref<384x128xbf16, #tpu.memory_space<vmem>>, vector<384x128xbf16>
    %cst_14 = arith.constant dense<0.000000e+00> : vector<32x128xf32>
    %46 = tpu.matmul %44, %45, %cst_14 {dimension_numbers = #tpu.dot_dimension_numbers<[1], [0], [0], [1], [0, 0, 1, 1], [], []>} : vector<32x384xbf16>, vector<384x128xbf16>, vector<32x128xf32> -> vector<32x128xf32>
    %c0_15 = arith.constant 0 : index
    %c0_16 = arith.constant 0 : index
    %47 = vector.load %arg4[%c0_15, %c0_16] : memref<2x128xf32, #tpu.memory_space<vmem>>, vector<1x128xf32>
    %48 = vector.broadcast %47 : vector<1x128xf32> to vector<32x128xf32>
    %49 = arith.addf %46, %48 : vector<32x128xf32>
    %cst_17 = arith.constant 0.000000e+00 : f32
    %50 = vector.broadcast %cst_17 : f32 to vector<32x128xf32>
    %51 = arith.maximumf %49, %50 : vector<32x128xf32>
    %cst_18 = arith.constant 0.000000e+00 : f32
    %52 = vector.broadcast %cst_18 : f32 to vector<32x128xf32>
    %c1_i32_19 = arith.constant 1 : i32
    %53 = tpu.dynamic_rotate %51 by %c1_i32_19 dim 0 : vector<32x128xf32>, i32 -> vector<32x128xf32>
    %54 = arith.select %18, %52, %53 : vector<32x128xi1>, vector<32x128xf32>
    %c31_i32_20 = arith.constant 31 : i32
    %55 = tpu.dynamic_rotate %51 by %c31_i32_20 dim 0 : vector<32x128xf32>, i32 -> vector<32x128xf32>
    %56 = arith.select %36, %52, %55 : vector<32x128xi1>, vector<32x128xf32>
    %57 = tpu.concatenate %54, %51, %56 in 1 : vector<32x128xf32>, vector<32x128xf32>, vector<32x128xf32> -> vector<32x384xf32>
    %58 = arith.truncf %57 : vector<32x384xf32> to vector<32x384xbf16>
    %c0_21 = arith.constant 0 : index
    %c0_22 = arith.constant 0 : index
    %59 = vector.load %arg3[%c0_21, %c0_22] : memref<384x128xbf16, #tpu.memory_space<vmem>>, vector<384x128xbf16>
    %cst_23 = arith.constant dense<0.000000e+00> : vector<32x128xf32>
    %60 = tpu.matmul %58, %59, %cst_23 {dimension_numbers = #tpu.dot_dimension_numbers<[1], [0], [0], [1], [0, 0, 1, 1], [], []>} : vector<32x384xbf16>, vector<384x128xbf16>, vector<32x128xf32> -> vector<32x128xf32>
    %c1 = arith.constant 1 : index
    %c0_24 = arith.constant 0 : index
    %61 = vector.load %arg4[%c1, %c0_24] : memref<2x128xf32, #tpu.memory_space<vmem>>, vector<1x128xf32>
    %62 = vector.broadcast %61 : vector<1x128xf32> to vector<32x128xf32>
    %63 = arith.addf %60, %62 : vector<32x128xf32>
    %64 = arith.addf %63, %37 : vector<32x128xf32>
    %cst_25 = arith.constant 0.000000e+00 : f32
    %65 = vector.broadcast %cst_25 : f32 to vector<32x128xf32>
    %66 = arith.maximumf %64, %65 : vector<32x128xf32>
    %c0_26 = arith.constant 0 : index
    %c0_27 = arith.constant 0 : index
    %67 = vector.load %arg5[%c0_26, %c0_27] : memref<32x128xf32, #tpu.memory_space<vmem>>, vector<32x128xf32>
    tpu.vector_store %arg5[%c0_26, %c0_27], %66 {strides = array<i32>} : memref<32x128xf32, #tpu.memory_space<vmem>>, vector<32x128xf32>,
    return
  }
  func.func @transform_0(%arg0: i32) -> (i32, i32) {
    %c0_i32 = arith.constant 0 : i32
    %c0_i32_0 = arith.constant 0 : i32
    return %arg0, %c0_i32 : i32, i32
  }
  func.func @transform_1(%arg0: i32) -> (i32, i32) {
    %c0_i32 = arith.constant 0 : i32
    %c0_i32_0 = arith.constant 0 : i32
    %c0_i32_1 = arith.constant 0 : i32
    return %c0_i32, %c0_i32_0 : i32, i32
  }
  func.func @transform_2(%arg0: i32) -> (i32, i32) {
    %c0_i32 = arith.constant 0 : i32
    %c0_i32_0 = arith.constant 0 : i32
    %c0_i32_1 = arith.constant 0 : i32
    return %c0_i32, %c0_i32_0 : i32, i32
  }
  func.func @transform_3(%arg0: i32) -> (i32, i32) {
    %c0_i32 = arith.constant 0 : i32
    %c0_i32_0 = arith.constant 0 : i32
    %c0_i32_1 = arith.constant 0 : i32
    return %c0_i32, %c0_i32_0 : i32, i32
  }
  func.func @transform_4(%arg0: i32) -> (i32, i32) {
    %c0_i32 = arith.constant 0 : i32
    %c0_i32_0 = arith.constant 0 : i32
    return %arg0, %c0_i32 : i32, i32
  }
}

</mosaic_0001>

<llo_original>
// kernel: tpu_custom_call.1
$region0: #{tpu_custom_call.1}
  #allocation0 [shape = 'u32[]', space=smem, size = 0x4, offset = 0x4, fixed_abs, tag = 'smem constant byte address 0x4 - core index']
  #allocation1 [shape = 'u32[72,128]{1,0:T(1,128)}', space=vmem, size = 0x9000, scoped, tag = 'internal scratch']
  %s0 = inlined_call_operand.hbm [shape: f32[32,128], index: 0, kind: input, shape index: {}]
  %s1 = inlined_call_operand.hbm [shape: bf16[384,128], index: 1, kind: input, shape index: {}]
  %s2 = inlined_call_operand.hbm [shape: bf16[384,128], index: 2, kind: input, shape index: {}]
  %s3 = inlined_call_operand.vmem [shape: f32[2,128], index: 3, kind: input, shape index: {}]
  %s4 = inlined_call_operand.hbm [shape: f32[32,128], index: 4, kind: output, shape index: {}]
  %s5 = sld [smem:[#allocation0]]
  $region38: #{tpu_custom_call.1} parent=0
    _
  %s7 = ssub.s32 1, %s5
  %s8 = scalar_select 0, %s7, %s5
  $region1: #{tpu_custom_call.1} parent=0
    #allocation2 [shape = 'u8[16384]{0}', space=vmem, size = 0x4000, scoped, tag = 'input window, operand 0, single buffered']
    #allocation3 [shape = 's32[1]{0}', space=sflag, size = 0x4, scoped, tag = 'scoped memory for tpu_custom_call.1']
    #allocation4 [shape = 's32[1]{0}', space=sflag, size = 0x4, scoped, tag = 'scoped memory for tpu_custom_call.1']
    #allocation5 [shape = 'u8[98304]{0}', space=vmem, size = 0x18000, scoped, tag = 'input window, operand 1, single buffered']
    #allocation6 [shape = 's32[1]{0}', space=sflag, size = 0x4, scoped, tag = 'scoped memory for tpu_custom_call.1']
    #allocation7 [shape = 'u8[98304]{0}', space=vmem, size = 0x18000, scoped, tag = 'input window, operand 2, single buffered']
    #allocation8 [shape = 'u8[16384]{0}', space=vmem, size = 0x4000, scoped, tag = 'output window, operand 0, single buffered']
    %9 = vsyncpa [#allocation3], 0
    %10 = vsyncpa [#allocation6], 0
    %11 = vsyncpa [#allocation4], 0
    // Predicated region
    $region2: #{tpu_custom_call.1} parent=1 // pred_check
      _
    $region3: #{tpu_custom_call.1} parent=1 // pred_check_branch
      %13 = sbr.rel (0) target = $region5
    $region4: #{tpu_custom_call.1} parent=1 // pred_region
      %15 = vsyncadd [#allocation3], 0
      %s16 = sshll.u32 %s0, 4
      %s17 = int_to_ptr.hbm [resolvable:$true] %s16
      %s18 = sshll.u32 [#allocation2], 4
      %s19 = int_to_ptr.vmem [resolvable:$true] %s18
      %24 = dma.hbm_to_vmem [thread:$0]  %s17, 512, %s19, [#allocation3], 128, 128, 8
    $region5: #{tpu_custom_call.1} parent=1 // pred_fallthru
      _
    // Predicated region
    $region6: #{tpu_custom_call.1} parent=1 // pred_check
      _
    $region7: #{tpu_custom_call.1} parent=1 // pred_check_branch
      %26 = sbr.rel (0) target = $region9
    $region8: #{tpu_custom_call.1} parent=1 // pred_region
      %28 = vsyncadd [#allocation6], 0
      %s29 = sshll.u32 %s1, 4
      %s30 = int_to_ptr.hbm [resolvable:$true] %s29
      %s31 = sshll.u32 [#allocation5], 4
      %s32 = int_to_ptr.vmem [resolvable:$true] %s31
      %37 = dma.hbm_to_vmem [thread:$0]  %s30, 3072, %s32, [#allocation6], 64, 64, 4
    $region9: #{tpu_custom_call.1} parent=1 // pred_fallthru
      _
    // Predicated region
    $region10: #{tpu_custom_call.1} parent=1 // pred_check
      _
    $region11: #{tpu_custom_call.1} parent=1 // pred_check_branch
      %39 = sbr.rel (0) target = $region13
    $region12: #{tpu_custom_call.1} parent=1 // pred_region
      %41 = vsyncadd [#allocation6], 0
      %s42 = sshll.u32 %s2, 4
      %s43 = int_to_ptr.hbm [resolvable:$true] %s42
      %s44 = sshll.u32 [#allocation7], 4
      %s45 = int_to_ptr.vmem [resolvable:$true] %s44
      %50 = dma.hbm_to_vmem [thread:$0]  %s43, 3072, %s45, [#allocation6], 64, 64, 4
    $region13: #{tpu_custom_call.1} parent=1 // pred_fallthru
      _
    // Predicated region
    $region14: #{tpu_custom_call.1} parent=1 // pred_check
      _
    $region15: #{tpu_custom_call.1} parent=1 // pred_check_branch
      %52 = sbr.rel (0) target = $region17
    $region16: #{tpu_custom_call.1} parent=1 // pred_region
      _
    $region17: #{tpu_custom_call.1} parent=1 // pred_fallthru
      _
    // Predicated region
    $region18: #{tpu_custom_call.1} parent=1 // pred_check
      _
    $region19: #{tpu_custom_call.1} parent=1 // pred_check_branch
      %54 = sbr.rel (0) target = $region21
    $region20: #{tpu_custom_call.1} parent=1 // pred_region
      %56 = dma.done [#allocation3], 512
    $region21: #{tpu_custom_call.1} parent=1 // pred_fallthru
      _
    // Predicated region
    $region22: #{tpu_custom_call.1} parent=1 // pred_check
      _
    $region23: #{tpu_custom_call.1} parent=1 // pred_check_branch
      %58 = sbr.rel (0) target = $region25
    $region24: #{tpu_custom_call.1} parent=1 // pred_region
      %60 = dma.done [#allocation6], 3072
    $region25: #{tpu_custom_call.1} parent=1 // pred_fallthru
      _
    // Predicated region
    $region26: #{tpu_custom_call.1} parent=1 // pred_check
      _
    $region27: #{tpu_custom_call.1} parent=1 // pred_check_branch
      %62 = sbr.rel (0) target = $region29
    $region28: #{tpu_custom_call.1} parent=1 // pred_region
      %64 = dma.done [#allocation6], 3072
    $region29: #{tpu_custom_call.1} parent=1 // pred_fallthru
      _
    %v65 = vlaneseq
    %v66 = vshrl.u32 %v65, 7
    %v67 = vadd.s32 %v66, 8
    %v68 = vadd.s32 %v66, 16
    %v69 = vadd.s32 %v66, 24
    %vm70 = vcmp.lt.s32.totalorder %v66, 0
    %v71 = vsub.s32 0, %v66
    %v72 = vsel %vm70, %v71, %v66
    %v73 = vshrl.u32 %v72, 4
    %v74 = vand.u32 %v72, 15
    %v75 = vsub.s32 0, %v74
    %v76 = vsel %vm70, %v75, %v74
    %vm77 = vcmp.lt.s32.totalorder %v67, 0
    %v78 = vsub.s32 0, %v67
    %v79 = vsel %vm77, %v78, %v67
    %v80 = vshrl.u32 %v79, 4
    %v81 = vand.u32 %v79, 15
    %v82 = vsub.s32 0, %v81
    %v83 = vsel %vm77, %v82, %v81
    %vm84 = vcmp.lt.s32.totalorder %v68, 0
    %v85 = vsub.s32 0, %v68
    %v86 = vsel %vm84, %v85, %v68
    %v87 = vshrl.u32 %v86, 4
    %v88 = vand.u32 %v86, 15
    %v89 = vsub.s32 0, %v88
    %v90 = vsel %vm84, %v89, %v88
    %vm91 = vcmp.lt.s32.totalorder %v69, 0
    %v92 = vsub.s32 0, %v69
    %v93 = vsel %vm91, %v92, %v69
    %v94 = vshrl.u32 %v93, 4
    %v95 = vand.u32 %v93, 15
    %v96 = vsub.s32 0, %v95
    %v97 = vsel %vm91, %v96, %v95
    %vm98 = vcmp.ne.s32.totalorder %v76, 0
    %vm99 = vcmp.ne.s32.totalorder %v83, 0
    %vm100 = vcmp.ne.s32.totalorder %v90, 0
    %vm101 = vcmp.ne.s32.totalorder %v97, 0
    %vm102 = vcmp.lt.s32.totalorder %v76, 0
    %vm103 = vcmp.lt.s32.totalorder %v83, 0
    %vm104 = vcmp.lt.s32.totalorder %v90, 0
    %vm105 = vcmp.lt.s32.totalorder %v97, 0
    %vm106 = vmand %vm102, %vm98
    %vm107 = vmand %vm103, %vm99
    %vm108 = vmand %vm104, %vm100
    %vm109 = vmand %vm105, %vm101
    %v110 = vadd.s32 %v76, 16
    %v111 = vadd.s32 %v83, 16
    %v112 = vadd.s32 %v90, 16
    %v113 = vadd.s32 %v97, 16
    %v114 = vsel %vm106, %v110, %v76
    %v115 = vsel %vm107, %v111, %v83
    %v116 = vsel %vm108, %v112, %v90
    %v117 = vsel %vm109, %v113, %v97
    %vm118 = vcmp.eq.s32.totalorder %v114, 0
    %vm119 = vcmp.eq.s32.totalorder %v115, 0
    %vm120 = vcmp.eq.s32.totalorder %v116, 0
    %vm121 = vcmp.eq.s32.totalorder %v117, 0
    %vm122 = vcmp.eq.s32.totalorder %v114, 15
    %vm123 = vcmp.eq.s32.totalorder %v115, 15
    %vm124 = vcmp.eq.s32.totalorder %v116, 15
    %vm125 = vcmp.eq.s32.totalorder %v117, 15
    %v126 = vld [vmem:[#allocation2] sm:$0xff]
    %v127 = vld [vmem:[#allocation2 + $0x8] sm:$0xff]
    %v128 = vld [vmem:[#allocation2 + $0x10] sm:$0xff]
    %v129 = vld [vmem:[#allocation2 + $0x18] sm:$0xff]
    %v130 = vrot.slane %v126, 7
    %v131 = vrot.slane %v127, 7
    %v132 = vrot.slane %v128, 7
    %v133 = vrot.slane %v129, 7
    %vm134 = vcmp.lt.s32.totalorder %v66, 1
    %v135 = vsel %vm134, %v132, %v133
    %v136 = vsel %vm134, %v131, %v132
    %v137 = vsel %vm134, %v130, %v131
    %v138 = vsel %vm134, %v133, %v130
    %v139 = vsel %vm118, 0.0, %v138
    %v140 = vsel %vm119, 0.0, %v137
    %v141 = vsel %vm120, 0.0, %v136
    %v142 = vsel %vm121, 0.0, %v135
    %v143 = vrot.slane %v126, 1
    %v144 = vrot.slane %v127, 1
    %v145 = vrot.slane %v128, 1
    %v146 = vrot.slane %v129, 1
    %vm147 = vcmp.lt.s32.totalorder %v66, 7
    %v148 = vsel %vm147, %v145, %v146
    %v149 = vsel %vm147, %v144, %v145
    %v150 = vsel %vm147, %v143, %v144
    %v151 = vsel %vm147, %v146, %v143
    %v152 = vsel %vm122, 0.0, %v150
    %v153 = vsel %vm123, 0.0, %v149
    %v154 = vsel %vm124, 0.0, %v148
    %v155 = vsel %vm125, 0.0, %v151
    %v156 = vpack.c.bf16 %v140, %v139
    %v157 = vpack.c.bf16 %v127, %v126
    %v158 = vpack.c.bf16 %v153, %v152
    %v159 = vpack.c.bf16 %v142, %v141
    %v160 = vpack.c.bf16 %v129, %v128
    %v161 = vpack.c.bf16 %v155, %v154
    %v162 = vld [vmem:[#allocation5] sm:$0xf]
    %v163 = vld [vmem:[#allocation5 + $0x4] sm:$0xf]
    %v164 = vld [vmem:[#allocation5 + $0x8] sm:$0xf]
    %v165 = vld [vmem:[#allocation5 + $0xc] sm:$0xf]
    %v166 = vld [vmem:[#allocation5 + $0x10] sm:$0xf]
    %v167 = vld [vmem:[#allocation5 + $0x14] sm:$0xf]
    %v168 = vld [vmem:[#allocation5 + $0x18] sm:$0xf]
    %v169 = vld [vmem:[#allocation5 + $0x1c] sm:$0xf]
    %v170 = vld [vmem:[#allocation5 + $0x20] sm:$0xf]
    %v171 = vld [vmem:[#allocation5 + $0x24] sm:$0xf]
    %v172 = vld [vmem:[#allocation5 + $0x28] sm:$0xf]
    %v173 = vld [vmem:[#allocation5 + $0x2c] sm:$0xf]
    %v174 = vld [vmem:[#allocation5 + $0x30] sm:$0xf]
    %v175 = vld [vmem:[#allocation5 + $0x34] sm:$0xf]
    %v176 = vld [vmem:[#allocation5 + $0x38] sm:$0xf]
    %v177 = vld [vmem:[#allocation5 + $0x3c] sm:$0xf]
    %v178 = vld [vmem:[#allocation5 + $0x40] sm:$0xf]
    %v179 = vld [vmem:[#allocation5 + $0x44] sm:$0xf]
    %v180 = vld [vmem:[#allocation5 + $0x48] sm:$0xf]
    %v181 = vld [vmem:[#allocation5 + $0x4c] sm:$0xf]
    %v182 = vld [vmem:[#allocation5 + $0x50] sm:$0xf]
    %v183 = vld [vmem:[#allocation5 + $0x54] sm:$0xf]
    %v184 = vld [vmem:[#allocation5 + $0x58] sm:$0xf]
    %v185 = vld [vmem:[#allocation5 + $0x5c] sm:$0xf]
    %v186 = vld [vmem:[#allocation5 + $0x60] sm:$0xf]
    %v187 = vld [vmem:[#allocation5 + $0x64] sm:$0xf]
    %v188 = vld [vmem:[#allocation5 + $0x68] sm:$0xf]
    %v189 = vld [vmem:[#allocation5 + $0x6c] sm:$0xf]
    %v190 = vld [vmem:[#allocation5 + $0x70] sm:$0xf]
    %v191 = vld [vmem:[#allocation5 + $0x74] sm:$0xf]
    %v192 = vld [vmem:[#allocation5 + $0x78] sm:$0xf]
    %v193 = vld [vmem:[#allocation5 + $0x7c] sm:$0xf]
    %v194 = vld [vmem:[#allocation5 + $0x80] sm:$0xf]
    %v195 = vld [vmem:[#allocation5 + $0x84] sm:$0xf]
    %v196 = vld [vmem:[#allocation5 + $0x88] sm:$0xf]
    %v197 = vld [vmem:[#allocation5 + $0x8c] sm:$0xf]
    %v198 = vld [vmem:[#allocation5 + $0x90] sm:$0xf]
    %v199 = vld [vmem:[#allocation5 + $0x94] sm:$0xf]
    %v200 = vld [vmem:[#allocation5 + $0x98] sm:$0xf]
    %v201 = vld [vmem:[#allocation5 + $0x9c] sm:$0xf]
    %v202 = vld [vmem:[#allocation5 + $0xa0] sm:$0xf]
    %v203 = vld [vmem:[#allocation5 + $0xa4] sm:$0xf]
    %v204 = vld [vmem:[#allocation5 + $0xa8] sm:$0xf]
    %v205 = vld [vmem:[#allocation5 + $0xac] sm:$0xf]
    %v206 = vld [vmem:[#allocation5 + $0xb0] sm:$0xf]
    %v207 = vld [vmem:[#allocation5 + $0xb4] sm:$0xf]
    %v208 = vld [vmem:[#allocation5 + $0xb8] sm:$0xf]
    %v209 = vld [vmem:[#allocation5 + $0xbc] sm:$0xf]
    %v210 = vld [vmem:[%s3] sm:$0x1]
    %v211 = vperm.slane %v210, 0
    %v260 = vunpack.c.l.b16 %v162
    %v261 = vunpack.c.l.b16 %v163
    %v262 = vunpack.c.l.b16 %v164
    %v263 = vunpack.c.l.b16 %v165
    %v264 = vunpack.c.l.b16 %v166
    %v265 = vunpack.c.l.b16 %v167
    %v266 = vunpack.c.l.b16 %v168
    %v267 = vunpack.c.l.b16 %v169
    %v268 = vunpack.c.l.b16 %v170
    %v269 = vunpack.c.l.b16 %v171
    %v270 = vunpack.c.l.b16 %v172
    %v271 = vunpack.c.l.b16 %v173
    %v272 = vunpack.c.l.b16 %v174
    %v273 = vunpack.c.l.b16 %v175
    %v274 = vunpack.c.l.b16 %v176
    %v275 = vunpack.c.l.b16 %v177
    %v276 = vunpack.c.l.b16 %v178
    %v277 = vunpack.c.l.b16 %v179
    %v278 = vunpack.c.l.b16 %v180
    %v279 = vunpack.c.l.b16 %v181
    %v280 = vunpack.c.l.b16 %v182
    %v281 = vunpack.c.l.b16 %v183
    %v282 = vunpack.c.l.b16 %v184
    %v283 = vunpack.c.l.b16 %v185
    %v284 = vunpack.c.l.b16 %v186
    %v285 = vunpack.c.l.b16 %v187
    %v286 = vunpack.c.l.b16 %v188
    %v287 = vunpack.c.l.b16 %v189
    %v288 = vunpack.c.l.b16 %v190
    %v289 = vunpack.c.l.b16 %v191
    %v290 = vunpack.c.l.b16 %v192
    %v291 = vunpack.c.l.b16 %v193
    %v292 = vunpack.c.l.b16 %v194
    %v293 = vunpack.c.l.b16 %v195
    %v294 = vunpack.c.l.b16 %v196
    %v295 = vunpack.c.l.b16 %v197
    %v296 = vunpack.c.l.b16 %v198
    %v297 = vunpack.c.l.b16 %v199
    %v298 = vunpack.c.l.b16 %v200
    %v299 = vunpack.c.l.b16 %v201
    %v300 = vunpack.c.l.b16 %v202
    %v301 = vunpack.c.l.b16 %v203
    %v302 = vunpack.c.l.b16 %v204
    %v303 = vunpack.c.l.b16 %v205
    %v304 = vunpack.c.l.b16 %v206
    %v305 = vunpack.c.l.b16 %v207
    %v306 = vunpack.c.l.b16 %v208
    %v307 = vunpack.c.l.b16 %v209
    %v308 = vpack.c.b16 %v261, %v260
    %v309 = vpack.c.b16 %v263, %v262
    %v310 = vpack.c.b16 %v265, %v264
    %v311 = vpack.c.b16 %v267, %v266
    %v312 = vpack.c.b16 %v269, %v268
    %v313 = vpack.c.b16 %v271, %v270
    %v314 = vpack.c.b16 %v273, %v272
    %v315 = vpack.c.b16 %v275, %v274
    %v316 = vpack.c.b16 %v277, %v276
    %v317 = vpack.c.b16 %v279, %v278
    %v318 = vpack.c.b16 %v281, %v280
    %v319 = vpack.c.b16 %v283, %v282
    %v320 = vpack.c.b16 %v285, %v284
    %v321 = vpack.c.b16 %v287, %v286
    %v322 = vpack.c.b16 %v289, %v288
    %v323 = vpack.c.b16 %v291, %v290
    %v324 = vpack.c.b16 %v293, %v292
    %v325 = vpack.c.b16 %v295, %v294
    %v326 = vpack.c.b16 %v297, %v296
    %v327 = vpack.c.b16 %v299, %v298
    %v328 = vpack.c.b16 %v301, %v300
    %v329 = vpack.c.b16 %v303, %v302
    %v330 = vpack.c.b16 %v305, %v304
    %v331 = vpack.c.b16 %v307, %v306
    %356 = vmatpush.bf16.msra.mxu0 %v315
    %357 = vmatpush.bf16.msra.mxu0 %v314
    %358 = vmatpush.bf16.msra.mxu0 %v313
    %359 = vmatpush.bf16.msra.mxu0 %v312
    %360 = vmatpush.bf16.msra.mxu0 %v311
    %361 = vmatpush.bf16.msra.mxu0 %v310
    %362 = vmatpush.bf16.msra.mxu0 %v309
    %363 = vmatpush.bf16.msra.mxu0 %v308
    %364 = vmatmul.bf16.gmra.mxu0 %v156
    %v365 = vpop.f32.mrf.mxu0
    %v366 = vadd.f32 %v211, %v365
    %v367 = vpop.f32.mrf.mxu0
    %v368 = vadd.f32 %v211, %v367
    %369 = vmatmul.bf16.gmra.mxu0 %v159
    %v370 = vpop.f32.mrf.mxu0
    %v371 = vadd.f32 %v211, %v370
    %v372 = vpop.f32.mrf.mxu0
    %v373 = vadd.f32 %v211, %v372
    %374 = vdwg.mxu0
    %375 = vmatpush.bf16.msra.mxu0 %v323
    %376 = vmatpush.bf16.msra.mxu0 %v322
    %377 = vmatpush.bf16.msra.mxu0 %v321
    %378 = vmatpush.bf16.msra.mxu0 %v320
    %379 = vmatpush.bf16.msra.mxu0 %v319
    %380 = vmatpush.bf16.msra.mxu0 %v318
    %381 = vmatpush.bf16.msra.mxu0 %v317
    %382 = vmatpush.bf16.msra.mxu0 %v316
    %383 = vmatmul.bf16.gmra.mxu0 %v157
    %v384 = vpop.f32.mrf.mxu0
    %v385 = vadd.f32 %v366, %v384
    %v386 = vpop.f32.mrf.mxu0
    %v387 = vadd.f32 %v368, %v386
    %388 = vmatmul.bf16.gmra.mxu0 %v160
    %v389 = vpop.f32.mrf.mxu0
    %v390 = vadd.f32 %v371, %v389
    %v391 = vpop.f32.mrf.mxu0
    %v392 = vadd.f32 %v373, %v391
    %393 = vdwg.mxu0
    %394 = vmatpush.bf16.msra.mxu0 %v331
    %395 = vmatpush.bf16.msra.mxu0 %v330
    %396 = vmatpush.bf16.msra.mxu0 %v329
    %397 = vmatpush.bf16.msra.mxu0 %v328
    %398 = vmatpush.bf16.msra.mxu0 %v327
    %399 = vmatpush.bf16.msra.mxu0 %v326
    %400 = vmatpush.bf16.msra.mxu0 %v325
    %401 = vmatpush.bf16.msra.mxu0 %v324
    %402 = vmatmul.bf16.gmra.mxu0 %v158
    %v403 = vpop.f32.mrf.mxu0
    %v404 = vadd.f32 %v385, %v403
    %v405 = vpop.f32.mrf.mxu0
    %v406 = vadd.f32 %v387, %v405
    %407 = vmatmul.bf16.gmra.mxu0 %v161
    %v408 = vpop.f32.mrf.mxu0
    %v409 = vadd.f32 %v390, %v408
    %v410 = vpop.f32.mrf.mxu0
    %v411 = vadd.f32 %v392, %v410
    %412 = vdwg.mxu0
    %v413 = vmax.f32 %v404, 0.0
    %v414 = vmax.f32 %v406, 0.0
    %v415 = vmax.f32 %v409, 0.0
    %v416 = vmax.f32 %v411, 0.0
    %v417 = vrot.slane %v413, 7
    %v418 = vrot.slane %v414, 7
    %v419 = vrot.slane %v415, 7
    %v420 = vrot.slane %v416, 7
    %v421 = vsel %vm134, %v419, %v420
    %v422 = vsel %vm134, %v418, %v419
    %v423 = vsel %vm134, %v417, %v418
    %v424 = vsel %vm134, %v420, %v417
    %v425 = vsel %vm118, 0.0, %v424
    %v426 = vsel %vm119, 0.0, %v423
    %v427 = vsel %vm120, 0.0, %v422
    %v428 = vsel %vm121, 0.0, %v421
    %v429 = vrot.slane %v413, 1
    %v430 = vrot.slane %v414, 1
    %v431 = vrot.slane %v415, 1
    %v432 = vrot.slane %v416, 1
    %v433 = vsel %vm147, %v431, %v432
    %v434 = vsel %vm147, %v430, %v431
    %v435 = vsel %vm147, %v429, %v430
    %v436 = vsel %vm147, %v432, %v429
    %v437 = vsel %vm122, 0.0, %v435
    %v438 = vsel %vm123, 0.0, %v434
    %v439 = vsel %vm124, 0.0, %v433
    %v440 = vsel %vm125, 0.0, %v436
    %v441 = vpack.c.bf16 %v426, %v425
    %v442 = vpack.c.bf16 %v414, %v413
    %v443 = vpack.c.bf16 %v438, %v437
    %v444 = vpack.c.bf16 %v428, %v427
    %v445 = vpack.c.bf16 %v416, %v415
    %v446 = vpack.c.bf16 %v440, %v439
    %v447 = vld [vmem:[#allocation7] sm:$0xf]
    %v448 = vld [vmem:[#allocation7 + $0x4] sm:$0xf]
    %v449 = vld [vmem:[#allocation7 + $0x8] sm:$0xf]
    %v450 = vld [vmem:[#allocation7 + $0xc] sm:$0xf]
    %v451 = vld [vmem:[#allocation7 + $0x10] sm:$0xf]
    %v452 = vld [vmem:[#allocation7 + $0x14] sm:$0xf]
    %v453 = vld [vmem:[#allocation7 + $0x18] sm:$0xf]
    %v454 = vld [vmem:[#allocation7 + $0x1c] sm:$0xf]
    %v455 = vld [vmem:[#allocation7 + $0x20] sm:$0xf]
    %v456 = vld [vmem:[#allocation7 + $0x24] sm:$0xf]
    %v457 = vld [vmem:[#allocation7 + $0x28] sm:$0xf]
    %v458 = vld [vmem:[#allocation7 + $0x2c] sm:$0xf]
    %v459 = vld [vmem:[#allocation7 + $0x30] sm:$0xf]
    %v460 = vld [vmem:[#allocation7 + $0x34] sm:$0xf]
    %v461 = vld [vmem:[#allocation7 + $0x38] sm:$0xf]
    %v462 = vld [vmem:[#allocation7 + $0x3c] sm:$0xf]
    %v463 = vld [vmem:[#allocation7 + $0x40] sm:$0xf]
    %v464 = vld [vmem:[#allocation7 + $0x44] sm:$0xf]
    %v465 = vld [vmem:[#allocation7 + $0x48] sm:$0xf]
    %v466 = vld [vmem:[#allocation7 + $0x4c] sm:$0xf]
    %v467 = vld [vmem:[#allocation7 + $0x50] sm:$0xf]
    %v468 = vld [vmem:[#allocation7 + $0x54] sm:$0xf]
    %v469 = vld [vmem:[#allocation7 + $0x58] sm:$0xf]
    %v470 = vld [vmem:[#allocation7 + $0x5c] sm:$0xf]
    %v471 = vld [vmem:[#allocation7 + $0x60] sm:$0xf]
    %v472 = vld [vmem:[#allocation7 + $0x64] sm:$0xf]
    %v473 = vld [vmem:[#allocation7 + $0x68] sm:$0xf]
    %v474 = vld [vmem:[#allocation7 + $0x6c] sm:$0xf]
    %v475 = vld [vmem:[#allocation7 + $0x70] sm:$0xf]
    %v476 = vld [vmem:[#allocation7 + $0x74] sm:$0xf]
    %v477 = vld [vmem:[#allocation7 + $0x78] sm:$0xf]
    %v478 = vld [vmem:[#allocation7 + $0x7c] sm:$0xf]
    %v479 = vld [vmem:[#allocation7 + $0x80] sm:$0xf]
    %v480 = vld [vmem:[#allocation7 + $0x84] sm:$0xf]
    %v481 = vld [vmem:[#allocation7 + $0x88] sm:$0xf]
    %v482 = vld [vmem:[#allocation7 + $0x8c] sm:$0xf]
    %v483 = vld [vmem:[#allocation7 + $0x90] sm:$0xf]
    %v484 = vld [vmem:[#allocation7 + $0x94] sm:$0xf]
    %v485 = vld [vmem:[#allocation7 + $0x98] sm:$0xf]
    %v486 = vld [vmem:[#allocation7 + $0x9c] sm:$0xf]
    %v487 = vld [vmem:[#allocation7 + $0xa0] sm:$0xf]
    %v488 = vld [vmem:[#allocation7 + $0xa4] sm:$0xf]
    %v489 = vld [vmem:[#allocation7 + $0xa8] sm:$0xf]
    %v490 = vld [vmem:[#allocation7 + $0xac] sm:$0xf]
    %v491 = vld [vmem:[#allocation7 + $0xb0] sm:$0xf]
    %v492 = vld [vmem:[#allocation7 + $0xb4] sm:$0xf]
    %v493 = vld [vmem:[#allocation7 + $0xb8] sm:$0xf]
    %v494 = vld [vmem:[#allocation7 + $0xbc] sm:$0xf]
    %v495 = vld [vmem:[%s3 + $0x1] sm:$0x1]
    %v496 = vperm.slane %v495, 0
    %v545 = vunpack.c.l.b16 %v447
    %v546 = vunpack.c.l.b16 %v448
    %v547 = vunpack.c.l.b16 %v449
    %v548 = vunpack.c.l.b16 %v450
    %v549 = vunpack.c.l.b16 %v451
    %v550 = vunpack.c.l.b16 %v452
    %v551 = vunpack.c.l.b16 %v453
    %v552 = vunpack.c.l.b16 %v454
    %v553 = vunpack.c.l.b16 %v455
    %v554 = vunpack.c.l.b16 %v456
    %v555 = vunpack.c.l.b16 %v457
    %v556 = vunpack.c.l.b16 %v458
    %v557 = vunpack.c.l.b16 %v459
    %v558 = vunpack.c.l.b16 %v460
    %v559 = vunpack.c.l.b16 %v461
    %v560 = vunpack.c.l.b16 %v462
    %v561 = vunpack.c.l.b16 %v463
    %v562 = vunpack.c.l.b16 %v464
    %v563 = vunpack.c.l.b16 %v465
    %v564 = vunpack.c.l.b16 %v466
    %v565 = vunpack.c.l.b16 %v467
    %v566 = vunpack.c.l.b16 %v468
    %v567 = vunpack.c.l.b16 %v469
    %v568 = vunpack.c.l.b16 %v470
    %v569 = vunpack.c.l.b16 %v471
    %v570 = vunpack.c.l.b16 %v472
    %v571 = vunpack.c.l.b16 %v473
    %v572 = vunpack.c.l.b16 %v474
    %v573 = vunpack.c.l.b16 %v475
    %v574 = vunpack.c.l.b16 %v476
    %v575 = vunpack.c.l.b16 %v477
    %v576 = vunpack.c.l.b16 %v478
    %v577 = vunpack.c.l.b16 %v479
    %v578 = vunpack.c.l.b16 %v480
    %v579 = vunpack.c.l.b16 %v481
    %v580 = vunpack.c.l.b16 %v482
    %v581 = vunpack.c.l.b16 %v483
    %v582 = vunpack.c.l.b16 %v484
    %v583 = vunpack.c.l.b16 %v485
    %v584 = vunpack.c.l.b16 %v486
    %v585 = vunpack.c.l.b16 %v487
    %v586 = vunpack.c.l.b16 %v488
    %v587 = vunpack.c.l.b16 %v489
    %v588 = vunpack.c.l.b16 %v490
    %v589 = vunpack.c.l.b16 %v491
    %v590 = vunpack.c.l.b16 %v492
    %v591 = vunpack.c.l.b16 %v493
    %v592 = vunpack.c.l.b16 %v494
    %v593 = vpack.c.b16 %v546, %v545
    %v594 = vpack.c.b16 %v548, %v547
    %v595 = vpack.c.b16 %v550, %v549
    %v596 = vpack.c.b16 %v552, %v551
    %v597 = vpack.c.b16 %v554, %v553
    %v598 = vpack.c.b16 %v556, %v555
    %v599 = vpack.c.b16 %v558, %v557
    %v600 = vpack.c.b16 %v560, %v559
    %v601 = vpack.c.b16 %v562, %v561
    %v602 = vpack.c.b16 %v564, %v563
    %v603 = vpack.c.b16 %v566, %v565
    %v604 = vpack.c.b16 %v568, %v567
    %v605 = vpack.c.b16 %v570, %v569
    %v606 = vpack.c.b16 %v572, %v571
    %v607 = vpack.c.b16 %v574, %v573
    %v608 = vpack.c.b16 %v576, %v575
    %v609 = vpack.c.b16 %v578, %v577
    %v610 = vpack.c.b16 %v580, %v579
    %v611 = vpack.c.b16 %v582, %v581
    %v612 = vpack.c.b16 %v584, %v583
    %v613 = vpack.c.b16 %v586, %v585
    %v614 = vpack.c.b16 %v588, %v587
    %v615 = vpack.c.b16 %v590, %v589
    %v616 = vpack.c.b16 %v592, %v591
    %641 = vmatpush.bf16.msra.mxu0 %v600
    %642 = vmatpush.bf16.msra.mxu0 %v599
    %643 = vmatpush.bf16.msra.mxu0 %v598
    %644 = vmatpush.bf16.msra.mxu0 %v597
    %645 = vmatpush.bf16.msra.mxu0 %v596
    %646 = vmatpush.bf16.msra.mxu0 %v595
    %647 = vmatpush.bf16.msra.mxu0 %v594
    %648 = vmatpush.bf16.msra.mxu0 %v593
    %649 = vmatmul.bf16.gmra.mxu0 %v441
    %v650 = vpop.f32.mrf.mxu0
    %v651 = vadd.f32 %v496, %v650
    %v652 = vpop.f32.mrf.mxu0
    %v653 = vadd.f32 %v496, %v652
    %654 = vmatmul.bf16.gmra.mxu0 %v444
    %v655 = vpop.f32.mrf.mxu0
    %v656 = vadd.f32 %v496, %v655
    %v657 = vpop.f32.mrf.mxu0
    %v658 = vadd.f32 %v496, %v657
    %659 = vdwg.mxu0
    %660 = vmatpush.bf16.msra.mxu0 %v608
    %661 = vmatpush.bf16.msra.mxu0 %v607
    %662 = vmatpush.bf16.msra.mxu0 %v606
    %663 = vmatpush.bf16.msra.mxu0 %v605
    %664 = vmatpush.bf16.msra.mxu0 %v604
    %665 = vmatpush.bf16.msra.mxu0 %v603
    %666 = vmatpush.bf16.msra.mxu0 %v602
    %667 = vmatpush.bf16.msra.mxu0 %v601
    %668 = vmatmul.bf16.gmra.mxu0 %v442
    %v669 = vpop.f32.mrf.mxu0
    %v670 = vadd.f32 %v651, %v669
    %v671 = vpop.f32.mrf.mxu0
    %v672 = vadd.f32 %v653, %v671
    %673 = vmatmul.bf16.gmra.mxu0 %v445
    %v674 = vpop.f32.mrf.mxu0
    %v675 = vadd.f32 %v656, %v674
    %v676 = vpop.f32.mrf.mxu0
    %v677 = vadd.f32 %v658, %v676
    %678 = vdwg.mxu0
    %679 = vmatpush.bf16.msra.mxu0 %v616
    %680 = vmatpush.bf16.msra.mxu0 %v615
    %681 = vmatpush.bf16.msra.mxu0 %v614
    %682 = vmatpush.bf16.msra.mxu0 %v613
    %683 = vmatpush.bf16.msra.mxu0 %v612
    %684 = vmatpush.bf16.msra.mxu0 %v611
    %685 = vmatpush.bf16.msra.mxu0 %v610
    %686 = vmatpush.bf16.msra.mxu0 %v609
    %687 = vmatmul.bf16.gmra.mxu0 %v443
    %v688 = vpop.f32.mrf.mxu0
    %v689 = vadd.f32 %v670, %v688
    %v690 = vpop.f32.mrf.mxu0
    %v691 = vadd.f32 %v672, %v690
    %692 = vmatmul.bf16.gmra.mxu0 %v446
    %v693 = vpop.f32.mrf.mxu0
    %v694 = vadd.f32 %v675, %v693
    %v695 = vpop.f32.mrf.mxu0
    %v696 = vadd.f32 %v677, %v695
    %697 = vdwg.mxu0
    %v698 = vadd.f32 %v689, %v126
    %v699 = vadd.f32 %v691, %v127
    %v700 = vadd.f32 %v694, %v128
    %v701 = vadd.f32 %v696, %v129
    %v702 = vmax.f32 %v698, 0.0
    %v703 = vmax.f32 %v699, 0.0
    %v704 = vmax.f32 %v700, 0.0
    %v705 = vmax.f32 %v701, 0.0
    %706 = vst [vmem:[#allocation8] sm:$0xff] %v702
    %707 = vst [vmem:[#allocation8 + $0x8] sm:$0xff] %v703
    %708 = vst [vmem:[#allocation8 + $0x10] sm:$0xff] %v704
    %709 = vst [vmem:[#allocation8 + $0x18] sm:$0xff] %v705
    // Predicated region
    $region30: #{tpu_custom_call.1} parent=1 // pred_check
      _
    $region31: #{tpu_custom_call.1} parent=1 // pred_check_branch
      %711 = sbr.rel (0) target = $region33
    $region32: #{tpu_custom_call.1} parent=1 // pred_region
      %713 = vsyncadd [#allocation4], 0
      %s714 = sshll.u32 [#allocation8], 4
      %s715 = int_to_ptr.vmem [resolvable:$true] %s714
      %s716 = sshll.u32 %s4, 4
      %s717 = int_to_ptr.hbm [resolvable:$true] %s716
      %722 = dma.vmem_to_hbm [thread:$0]  %s715, 512, %s717, [#allocation4], 128, 128, 8
    $region33: #{tpu_custom_call.1} parent=1 // pred_fallthru
      _
    // Predicated region
    $region34: #{tpu_custom_call.1} parent=1 // pred_check
      _
    $region35: #{tpu_custom_call.1} parent=1 // pred_check_branch
      %724 = sbr.rel (0) target = $region37
    $region36: #{tpu_custom_call.1} parent=1 // pred_region
      %726 = dma.done [#allocation4], 512
    $region37: #{tpu_custom_call.1} parent=1 // pred_fallthru
      _
    %727 = vsyncpa [#allocation3], 1
    %728 = vsyncpa [#allocation6], 1
    %729 = vsyncpa [#allocation4], 1

</llo_original>
